<compile_context>
chip_gen: v7x
topology: tpu7x:2x2x1
jax: 0.10.0
libtpu: 0.0.40
codegen_flags: <defaults>
</compile_context>

<pallas_src>
import jax
import jax.numpy as jnp
from jax.experimental import pallas as pl
from jax.experimental.pallas import tpu as pltpu


# ------------------------------- Pallas kernel --------------------------------
def _adjoint_1x1_kernel(w_ref, x_ref, o_ref):
    # w_ref: (Cout, Cin)       transposed 1x1 weight, VMEM-resident across grid
    # x_ref: (Bblk, Cin, HW)   block of batch elements; channels on sublanes,
    #                          pixels on the lane axis
    # o_ref: (Bblk, Cout, HW)  lane-dense output block
    w = w_ref[...]  # hoisted: loaded once per grid step
    # Static (trace-time) unroll over the small batch block; each iteration is
    # one MXU matmul (Cout, Cin) @ (Cin, HW) plus an unmasked lane-dense store.
    for b in range(x_ref.shape[0]):
        o_ref[b, :, :] = jnp.dot(
            w, x_ref[b, :, :], preferred_element_type=jnp.float32
        ).astype(o_ref.dtype)


def _pick_batch_block(N, Cin, Cout, HW, *, max_block=8, budget_bytes=4 << 20):
    """Largest divisor of N that keeps the double-buffered x/out blocks under a
    conservative VMEM budget and the in-kernel unroll short."""
    per_elem = (Cin + Cout) * HW * 4              # f32 x-block + out-block bytes
    cap = max(1, min(max_block, budget_bytes // max(1, 2 * per_elem)))
    blk = 1
    for d in range(1, min(N, cap) + 1):
        if N % d == 0:
            blk = d
    return blk


def adjoint_out_conv_forward(x_nchw, weight):
    """ConvTranspose2d(kernel_size=1, stride=1, bias=False) forward.

    x_nchw: (N, Cin, H, W) float32
    weight: (Cin, Cout, 1, 1) float32  (PyTorch ConvTranspose2d layout; shared
            storage with the forward out_conv Conv2d weight)
    returns (N, Cout, H, W) float32 (NCHW, matching PyTorch)
    """
    N, Cin, H, W = x_nchw.shape
    Cout = weight.shape[1]
    HW = H * W

    x2 = x_nchw.reshape(N, Cin, HW)                    # free reshape (NCHW contiguous)
    w_mat = jnp.transpose(weight[:, :, 0, 0], (1, 0))  # (Cout, Cin)

    bblk = _pick_batch_block(N, Cin, Cout, HW)

    out = pl.pallas_call(
        _adjoint_1x1_kernel,
        out_shape=jax.ShapeDtypeStruct((N, Cout, HW), jnp.float32),
        grid_spec=pltpu.PrefetchScalarGridSpec(
            num_scalar_prefetch=0,
            grid=(N // bblk,),
            in_specs=[
                # tiny full weight, same block every step -> resident in VMEM
                pl.BlockSpec((Cout, Cin), lambda n: (0, 0)),
                # one block of batch elements per step
                pl.BlockSpec((bblk, Cin, HW), lambda n: (n, 0, 0)),
            ],
            out_specs=pl.BlockSpec((bblk, Cout, HW), lambda n: (n, 0, 0)),
        ),
        compiler_params=pltpu.CompilerParams(
            dimension_semantics=("parallel",)),
    )(w_mat, x2)

    return out.reshape(N, Cout, H, W)


# ------------------------------------ demo ------------------------------------
if __name__ == "__main__":
    # Shapes consistent with the ISTA-U-Net out_conv:
    #   out_conv: Conv2d(in_channels=widths[-1]=8, out_channels=n_classes=3, k=1)
    #   adjoint_out_conv: ConvTranspose2d(in_channels=3, out_channels=8, k=1)
    N, CIN, COUT, H, W = 2, 3, 8, 16, 16

    key = jax.random.PRNGKey(0)
    k_x, k_w = jax.random.split(key)
    x = jax.random.normal(k_x, (N, CIN, H, W), jnp.float32)
    weight = jax.random.normal(k_w, (CIN, COUT, 1, 1), jnp.float32) / jnp.sqrt(float(COUT))

    out = jax.jit(adjoint_out_conv_forward)(x, weight)
    out = jax.block_until_ready(out)

    # pure-JAX reference: out[n,co,h,w] = sum_ci weight[ci,co] * x[n,ci,h,w]
    ref = jnp.einsum("io,nihw->nohw", weight[:, :, 0, 0], x)

    assert out.shape == (N, COUT, H, W)
    assert bool(jnp.all(jnp.isfinite(out)))
    assert bool(jnp.allclose(out, ref, rtol=1e-5, atol=1e-5))
    print("KERNEL_OK")
</pallas_src>

<mosaic_0001>
module attributes {stable_mosaic.version = 11 : i64} {
  func.func @_adjoint_1x1_kernel(%arg0: i32, %arg1: memref<8x3xf32, #tpu.memory_space<vmem>>, %arg2: memref<2x3x256xf32, #tpu.memory_space<vmem>>, %arg3: memref<2x8x256xf32, #tpu.memory_space<vmem>>) attributes {dimension_semantics = [#tpu.dimension_semantics<parallel>], iteration_bounds = array<i64: 1>, scalar_prefetch = 0 : i64, scratch_operands = 0 : i64, tpu.core_type = #tpu.core_type<tc>, window_params = [{pipeline_mode = #tpu.pipeline_mode<synchronous>, transform_indices = @transform_0, window_bounds = array<i64: 8, 3>}, {transform_indices = @transform_1, window_bounds = array<i64: 2, 3, 256>}, {transform_indices = @transform_2, window_bounds = array<i64: 2, 8, 256>}]} {
    %c0 = arith.constant 0 : index
    %c0_0 = arith.constant 0 : index
    %0 = vector.load %arg1[%c0, %c0_0] : memref<8x3xf32, #tpu.memory_space<vmem>>, vector<8x3xf32>
    %c0_1 = arith.constant 0 : index
    %c0_2 = arith.constant 0 : index
    %c0_3 = arith.constant 0 : index
    %1 = vector.load %arg2[%c0_1, %c0_2, %c0_3] : memref<2x3x256xf32, #tpu.memory_space<vmem>>, vector<1x3x256xf32>
    %2 = vector.shape_cast %1 : vector<1x3x256xf32> to vector<3x256xf32>
    %cst = arith.constant dense<0.000000e+00> : vector<8x256xf32>
    %3 = tpu.matmul %0, %2, %cst {dimension_numbers = #tpu.dot_dimension_numbers<[1], [0], [0], [1], [0, 0, 1, 1], [], []>} : vector<8x3xf32>, vector<3x256xf32>, vector<8x256xf32> -> vector<8x256xf32>
    %c0_4 = arith.constant 0 : index
    %c0_5 = arith.constant 0 : index
    %c0_6 = arith.constant 0 : index
    %4 = vector.load %arg3[%c0_4, %c0_5, %c0_6] : memref<2x8x256xf32, #tpu.memory_space<vmem>>, vector<1x8x256xf32>
    %5 = vector.shape_cast %4 : vector<1x8x256xf32> to vector<8x256xf32>
    %6 = vector.shape_cast %3 : vector<8x256xf32> to vector<1x8x256xf32>
    tpu.vector_store %arg3[%c0_4, %c0_5, %c0_6], %6 {strides = array<i32>} : memref<2x8x256xf32, #tpu.memory_space<vmem>>, vector<1x8x256xf32>,
    %c1 = arith.constant 1 : index
    %c0_7 = arith.constant 0 : index
    %c0_8 = arith.constant 0 : index
    %7 = vector.load %arg2[%c1, %c0_7, %c0_8] : memref<2x3x256xf32, #tpu.memory_space<vmem>>, vector<1x3x256xf32>
    %8 = vector.shape_cast %7 : vector<1x3x256xf32> to vector<3x256xf32>
    %cst_9 = arith.constant dense<0.000000e+00> : vector<8x256xf32>
    %9 = tpu.matmul %0, %8, %cst_9 {dimension_numbers = #tpu.dot_dimension_numbers<[1], [0], [0], [1], [0, 0, 1, 1], [], []>} : vector<8x3xf32>, vector<3x256xf32>, vector<8x256xf32> -> vector<8x256xf32>
    %c1_10 = arith.constant 1 : index
    %c0_11 = arith.constant 0 : index
    %c0_12 = arith.constant 0 : index
    %10 = vector.load %arg3[%c1_10, %c0_11, %c0_12] : memref<2x8x256xf32, #tpu.memory_space<vmem>>, vector<1x8x256xf32>
    %11 = vector.shape_cast %10 : vector<1x8x256xf32> to vector<8x256xf32>
    %12 = vector.shape_cast %9 : vector<8x256xf32> to vector<1x8x256xf32>
    tpu.vector_store %arg3[%c1_10, %c0_11, %c0_12], %12 {strides = array<i32>} : memref<2x8x256xf32, #tpu.memory_space<vmem>>, vector<1x8x256xf32>,
    return
  }
  func.func @transform_0(%arg0: i32) -> (i32, i32) {
    %c0_i32 = arith.constant 0 : i32
    %c0_i32_0 = arith.constant 0 : i32
    %c0_i32_1 = arith.constant 0 : i32
    return %c0_i32, %c0_i32_0 : i32, i32
  }
  func.func @transform_1(%arg0: i32) -> (i32, i32, i32) {
    %c0_i32 = arith.constant 0 : i32
    %c0_i32_0 = arith.constant 0 : i32
    %c0_i32_1 = arith.constant 0 : i32
    return %arg0, %c0_i32, %c0_i32_0 : i32, i32, i32
  }
  func.func @transform_2(%arg0: i32) -> (i32, i32, i32) {
    %c0_i32 = arith.constant 0 : i32
    %c0_i32_0 = arith.constant 0 : i32
    %c0_i32_1 = arith.constant 0 : i32
    return %arg0, %c0_i32, %c0_i32_0 : i32, i32, i32
  }
}

</mosaic_0001>

<llo_original>
// kernel: adjoint_out_conv_forward.1
$region0: #{adjoint_out_conv_forward.1}
  #allocation0 [shape = 'u32[]', space=smem, size = 0x4, offset = 0x4, fixed_abs, tag = 'smem constant byte address 0x4 - core index']
  #allocation1 [shape = 'u32[144,128]{1,0:T(1,128)}', space=vmem, size = 0x12000, scoped, tag = 'internal scratch']
  %s0 = inlined_call_operand.vmem [shape: f32[8,3], index: 0, kind: input, shape index: {}]
  %s1 = inlined_call_operand.vmem [shape: f32[2,3,256], index: 1, kind: input, shape index: {}]
  %s2 = inlined_call_operand.vmem [shape: f32[2,8,256], index: 2, kind: output, shape index: {}]
  %s3 = sld [smem:[#allocation0]]
  $region18: #{adjoint_out_conv_forward.1} parent=0
    _
  %s5 = ssub.s32 1, %s3
  %s6 = scalar_select 0, %s5, %s3
  // Predicated region
  $region2: #{adjoint_out_conv_forward.1} parent=0 // pred_check
    _
  $region3: #{adjoint_out_conv_forward.1} parent=0 // pred_check_branch
    %8 = sbr.rel (0) target = $region5
  $region4: #{adjoint_out_conv_forward.1} parent=0 // pred_region
    _
  $region5: #{adjoint_out_conv_forward.1} parent=0 // pred_fallthru
    _
  // Predicated region
  $region6: #{adjoint_out_conv_forward.1} parent=0 // pred_check
    _
  $region7: #{adjoint_out_conv_forward.1} parent=0 // pred_check_branch
    %10 = sbr.rel (0) target = $region9
  $region8: #{adjoint_out_conv_forward.1} parent=0 // pred_region
    _
  $region9: #{adjoint_out_conv_forward.1} parent=0 // pred_fallthru
    _
  %v11 = vld [vmem:[%s0] sm:$0xff]
  %v12 = vld [vmem:[%s1] sm:$0x77]
  %v14 = vcombine.high %v12, %v12
  %vm15 = vcmask 23552
  %v17 = vsel %vm15, %v11, 0
  %vm19 = vcmask 1042432
  %v20 = vsel %vm19, %v12, 0
  %v22 = vsel %vm19, %v14, 0
  %24 = vmatprep.subr.mxu0 %v22
  %25 = vmatpush1.msra.mxu0 %v20
  %26 = vmatprep.subr.mxu0 0.0
  %27 = vmatpush1.msra.mxu0 0.0
  %28 = vmatprep.subr.mxu0 0.0
  %29 = vmatpush1.msra.mxu0 0.0
  %30 = vmatprep.subr.mxu0 0.0
  %31 = vmatpush1.msra.mxu0 0.0
  %32 = vmatprep.subr.mxu0 0.0
  %33 = vmatpush1.msra.mxu0 0.0
  %34 = vmatprep.subr.mxu0 0.0
  %35 = vmatpush1.msra.mxu0 0.0
  %36 = vmatprep.subr.mxu0 0.0
  %37 = vmatpush1.msra.mxu0 0.0
  %38 = vmatprep.subr.mxu0 0.0
  %39 = vmatpush1.msra.mxu0 0.0
  %40 = vmatprep.subr.mxu0 0.0
  %41 = vmatpush1.msra.mxu0 0.0
  %42 = vmatprep.subr.mxu0 0.0
  %43 = vmatpush1.msra.mxu0 0.0
  %44 = vmatprep.subr.mxu0 0.0
  %45 = vmatpush1.msra.mxu0 0.0
  %46 = vmatprep.subr.mxu0 0.0
  %47 = vmatpush1.msra.mxu0 0.0
  %48 = vmatprep.subr.mxu0 0.0
  %49 = vmatpush1.msra.mxu0 0.0
  %50 = vmatprep.subr.mxu0 0.0
  %51 = vmatpush1.msra.mxu0 0.0
  %52 = vmatprep.subr.mxu0 0.0
  %53 = vmatpush1.msra.mxu0 0.0
  %54 = vmatprep.subr.mxu0 0.0
  %55 = vmatpush1.msra.mxu0 0.0
  %56 = vmatprep.subr.mxu0 0.0
  %57 = vmatpush1.msra.mxu0 0.0
  %58 = vmatprep.subr.mxu0 0.0
  %59 = vmatpush1.msra.mxu0 0.0
  %60 = vmatprep.subr.mxu0 0.0
  %61 = vmatpush1.msra.mxu0 0.0
  %62 = vmatprep.subr.mxu0 0.0
  %63 = vmatpush1.msra.mxu0 0.0
  %64 = vmatprep.subr.mxu0 0.0
  %65 = vmatpush1.msra.mxu0 0.0
  %66 = vmatprep.subr.mxu0 0.0
  %67 = vmatpush1.msra.mxu0 0.0
  %68 = vmatprep.subr.mxu0 0.0
  %69 = vmatpush1.msra.mxu0 0.0
  %70 = vmatprep.subr.mxu0 0.0
  %71 = vmatpush1.msra.mxu0 0.0
  %72 = vmatprep.subr.mxu0 0.0
  %73 = vmatpush1.msra.mxu0 0.0
  %74 = vmatprep.subr.mxu0 0.0
  %75 = vmatpush1.msra.mxu0 0.0
  %76 = vmatprep.subr.mxu0 0.0
  %77 = vmatpush1.msra.mxu0 0.0
  %78 = vmatprep.subr.mxu0 0.0
  %79 = vmatpush1.msra.mxu0 0.0
  %80 = vmatprep.subr.mxu0 0.0
  %81 = vmatpush1.msra.mxu0 0.0
  %82 = vmatprep.subr.mxu0 0.0
  %83 = vmatpush1.msra.mxu0 0.0
  %84 = vmatprep.subr.mxu0 0.0
  %85 = vmatpush1.msra.mxu0 0.0
  %86 = vmatprep.subr.mxu0 0.0
  %87 = vmatpush1.msra.mxu0 0.0
  %88 = vmatprep.mubr.f32.mxu0 0.0
  %89 = vmatmul.mubr.f32.gmra.mrb[0].mxu0 %v17
  %v90 = vpop.f32.mrb[0].mxu0
  %v91 = vadd.f32 0.0, %v90
  %v92 = vpop.f32.mrb[0].mxu0
  %v93 = vadd.f32 0.0, %v92
  %94 = vdwg.mxu0
  %95 = vst [vmem:[%s2] sm:$0xff] %v91
  %96 = vst [vmem:[%s2 + $0x8] sm:$0xff] %v93
  %s97 = scalar_lea.vmem %s1, 8
  %v98 = vld [vmem:[%s97] sm:$0x77]
  %v100 = vcombine.high %v98, %v98
  %v101 = vsel %vm19, %v98, 0
  %v103 = vsel %vm19, %v100, 0
  %105 = vmatprep.subr.mxu0 %v103
  %106 = vmatpush1.msra.mxu0 %v101
  %107 = vmatprep.subr.mxu0 0.0
  %108 = vmatpush1.msra.mxu0 0.0
  %109 = vmatprep.subr.mxu0 0.0
  %110 = vmatpush1.msra.mxu0 0.0
  %111 = vmatprep.subr.mxu0 0.0
  %112 = vmatpush1.msra.mxu0 0.0
  %113 = vmatprep.subr.mxu0 0.0
  %114 = vmatpush1.msra.mxu0 0.0
  %115 = vmatprep.subr.mxu0 0.0
  %116 = vmatpush1.msra.mxu0 0.0
  %117 = vmatprep.subr.mxu0 0.0
  %118 = vmatpush1.msra.mxu0 0.0
  %119 = vmatprep.subr.mxu0 0.0
  %120 = vmatpush1.msra.mxu0 0.0
  %121 = vmatprep.subr.mxu0 0.0
  %122 = vmatpush1.msra.mxu0 0.0
  %123 = vmatprep.subr.mxu0 0.0
  %124 = vmatpush1.msra.mxu0 0.0
  %125 = vmatprep.subr.mxu0 0.0
  %126 = vmatpush1.msra.mxu0 0.0
  %127 = vmatprep.subr.mxu0 0.0
  %128 = vmatpush1.msra.mxu0 0.0
  %129 = vmatprep.subr.mxu0 0.0
  %130 = vmatpush1.msra.mxu0 0.0
  %131 = vmatprep.subr.mxu0 0.0
  %132 = vmatpush1.msra.mxu0 0.0
  %133 = vmatprep.subr.mxu0 0.0
  %134 = vmatpush1.msra.mxu0 0.0
  %135 = vmatprep.subr.mxu0 0.0
  %136 = vmatpush1.msra.mxu0 0.0
  %137 = vmatprep.subr.mxu0 0.0
  %138 = vmatpush1.msra.mxu0 0.0
  %139 = vmatprep.subr.mxu0 0.0
  %140 = vmatpush1.msra.mxu0 0.0
  %141 = vmatprep.subr.mxu0 0.0
  %142 = vmatpush1.msra.mxu0 0.0
  %143 = vmatprep.subr.mxu0 0.0
  %144 = vmatpush1.msra.mxu0 0.0
  %145 = vmatprep.subr.mxu0 0.0
  %146 = vmatpush1.msra.mxu0 0.0
  %147 = vmatprep.subr.mxu0 0.0
  %148 = vmatpush1.msra.mxu0 0.0
  %149 = vmatprep.subr.mxu0 0.0
  %150 = vmatpush1.msra.mxu0 0.0
  %151 = vmatprep.subr.mxu0 0.0
  %152 = vmatpush1.msra.mxu0 0.0
  %153 = vmatprep.subr.mxu0 0.0
  %154 = vmatpush1.msra.mxu0 0.0
  %155 = vmatprep.subr.mxu0 0.0
  %156 = vmatpush1.msra.mxu0 0.0
  %157 = vmatprep.subr.mxu0 0.0
  %158 = vmatpush1.msra.mxu0 0.0
  %159 = vmatprep.subr.mxu0 0.0
  %160 = vmatpush1.msra.mxu0 0.0
  %161 = vmatprep.subr.mxu0 0.0
  %162 = vmatpush1.msra.mxu0 0.0
  %163 = vmatprep.subr.mxu0 0.0
  %164 = vmatpush1.msra.mxu0 0.0
  %165 = vmatprep.subr.mxu0 0.0
  %166 = vmatpush1.msra.mxu0 0.0
  %167 = vmatprep.subr.mxu0 0.0
  %168 = vmatpush1.msra.mxu0 0.0
  %169 = vmatprep.mubr.f32.mxu0 0.0
  %170 = vmatmul.mubr.f32.gmra.mrb[0].mxu0 %v17
  %v171 = vpop.f32.mrb[0].mxu0
  %v172 = vadd.f32 0.0, %v171
  %v173 = vpop.f32.mrb[0].mxu0
  %v174 = vadd.f32 0.0, %v173
  %175 = vdwg.mxu0
  %s176 = scalar_lea.vmem %s2, 16
  %177 = vst [vmem:[%s176] sm:$0xff] %v172
  %178 = vst [vmem:[%s176 + $0x8] sm:$0xff] %v174
  // Predicated region
  $region10: #{adjoint_out_conv_forward.1} parent=0 // pred_check
    _
  $region11: #{adjoint_out_conv_forward.1} parent=0 // pred_check_branch
    %180 = sbr.rel (0) target = $region13
  $region12: #{adjoint_out_conv_forward.1} parent=0 // pred_region
    _
  $region13: #{adjoint_out_conv_forward.1} parent=0 // pred_fallthru
    _
  // Predicated region
  $region14: #{adjoint_out_conv_forward.1} parent=0 // pred_check
    _
  $region15: #{adjoint_out_conv_forward.1} parent=0 // pred_check_branch
    %182 = sbr.rel (0) target = $region17
  $region16: #{adjoint_out_conv_forward.1} parent=0 // pred_region
    _
  $region17: #{adjoint_out_conv_forward.1} parent=0 // pred_fallthru
    _

</llo_original>
